<compile_context>
chip_gen: v5e
topology: v5e:2x2
jax: 0.10.0
libtpu: 0.0.40
codegen_flags: <defaults>
</compile_context>

<pallas_src>
import jax
import jax.numpy as jnp
from jax.experimental import pallas as pl
from jax.experimental.pallas import tpu as pltpu

D_IN = 32
D_HID = 64
D_OUT = 32

# Max batch rows per grid step.  At TB=8192 (f32, lanes padded to 128 in VMEM):
#   x tile ~4 MiB, out tile ~4 MiB (x2 for double buffering) + hidden ~4 MiB
#   + weights < 20 KiB  ->  ~25 MiB peak, under the 48 MiB limit below.
TB_MAX = 8192


def _round_up(n, m):
    return ((n + m - 1) // m) * m


def _cdiv(a, b):
    return -(-a // b)


def mlp_kernel(x_ref, w1t_ref, b1_ref, w2t_ref, b2_ref, o_ref):
    """One batch tile, natural batch-major layout.

    x_ref  : (TB, D_IN)      input tile
    w1t_ref: (D_IN, D_HID)   W1.T, VMEM-resident across the grid
    b1_ref : (1, D_HID)
    w2t_ref: (D_HID, D_OUT)  W2.T, VMEM-resident across the grid
    b2_ref : (1, D_OUT)
    o_ref  : (TB, D_OUT)     output tile
    """
    x = x_ref[...]

    # Linear 32 -> 64 + ReLU : (TB,32) @ (32,64) -> (TB,64), f32 accumulation.
    h = jnp.dot(x, w1t_ref[...], preferred_element_type=jnp.float32)
    h = jnp.maximum(h + b1_ref[...], 0.0)

    # Linear 64 -> 32 + ReLU : (TB,64) @ (64,32) -> (TB,32).
    y = jnp.dot(h, w2t_ref[...], preferred_element_type=jnp.float32)
    y = jnp.maximum(y + b2_ref[...], 0.0)

    o_ref[...] = y.astype(o_ref.dtype)


def mlp_forward(x, w1, b1, w2, b2, *, tb_max=TB_MAX):
    """ReLU(Linear(ReLU(Linear(x)))) with PyTorch weight layout.

    x  : (B, 32) f32
    w1 : (64, 32), b1 : (64,)
    w2 : (32, 64), b2 : (32,)
    returns (B, 32) f32
    """
    B = x.shape[0]

    # Tile selection: balance tiles to cap padding at <128 rows/tile, and use
    # >=2 tiles for moderate B so both v7x TensorCores get work.
    n_tiles = max(_cdiv(B, tb_max), 1)
    if n_tiles == 1 and B > 256:
        n_tiles = 2
    TB = _round_up(_cdiv(B, n_tiles), 128)
    Bp = n_tiles * TB

    # Pad the batch dimension only when needed (no-op when B % TB == 0, which
    # is the common case for large, 128-aligned batches).
    xp = jnp.pad(x, ((0, Bp - B), (0, 0))) if Bp != B else x

    # Tiny one-time relayouts of the params (a few KiB, negligible).
    w1t = w1.T                     # (32, 64)
    w2t = w2.T                     # (64, 32)
    b1r = b1.reshape(1, D_HID)
    b2r = b2.reshape(1, D_OUT)

    itemsize = jnp.dtype(x.dtype).itemsize
    cost = pl.CostEstimate(
        flops=2 * Bp * D_IN * D_HID + 2 * Bp * D_HID * D_OUT,
        transcendentals=0,
        bytes_accessed=(Bp * D_IN + Bp * D_OUT
                        + D_IN * D_HID + D_HID
                        + D_HID * D_OUT + D_OUT) * itemsize,
    )

    out = pl.pallas_call(
        mlp_kernel,
        out_shape=jax.ShapeDtypeStruct((Bp, D_OUT), x.dtype),
        grid_spec=pl.GridSpec(
            grid=(n_tiles,),
            in_specs=[
                pl.BlockSpec((TB, D_IN), lambda i: (i, 0)),        # x tile (streams)
                pl.BlockSpec((D_IN, D_HID), lambda i: (0, 0)),     # W1.T (resident)
                pl.BlockSpec((1, D_HID), lambda i: (0, 0)),        # b1   (resident)
                pl.BlockSpec((D_HID, D_OUT), lambda i: (0, 0)),    # W2.T (resident)
                pl.BlockSpec((1, D_OUT), lambda i: (0, 0)),        # b2   (resident)
            ],
            out_specs=pl.BlockSpec((TB, D_OUT), lambda i: (i, 0)),
        ),
        compiler_params=pltpu.CompilerParams(
            # Independent batch tiles -> shard across both TCs on v7x.
            dimension_semantics=("parallel",),
            # ~25 MiB working set at TB=8192; 48 MiB keeps >25% headroom on
            # v7x (64 MiB physical) and is trivially fine on v5e/v6e (128 MiB).
            vmem_limit_bytes=48 * 1024 * 1024,
        ),
        cost_estimate=cost,
    )(xp, w1t, b1r, w2t, b2r)

    # Drop padded batch rows (no-op slice when Bp == B).
    return out[:B] if Bp != B else out


def init_params(key):
    # Deterministic init mimicking PyTorch nn.Linear (uniform +/- 1/sqrt(fan_in)),
    # weights stored in PyTorch (out_features, in_features) layout.
    k1, k2, k3, k4 = jax.random.split(key, 4)
    lim1 = 1.0 / jnp.sqrt(jnp.float32(D_IN))
    lim2 = 1.0 / jnp.sqrt(jnp.float32(D_HID))
    w1 = jax.random.uniform(k1, (D_HID, D_IN), jnp.float32, -lim1, lim1)
    b1 = jax.random.uniform(k2, (D_HID,), jnp.float32, -lim1, lim1)
    w2 = jax.random.uniform(k3, (D_OUT, D_HID), jnp.float32, -lim2, lim2)
    b2 = jax.random.uniform(k4, (D_OUT,), jnp.float32, -lim2, lim2)
    return w1, b1, w2, b2


if __name__ == "__main__":
    key = jax.random.PRNGKey(0)
    kx, kp = jax.random.split(key)
    B = 8
    x = jax.random.normal(kx, (B, D_IN), jnp.float32)
    w1, b1, w2, b2 = init_params(kp)

    out = jax.jit(mlp_forward)(x, w1, b1, w2, b2)
    jax.block_until_ready(out)

    # Reference check in plain JAX (PyTorch convention: y = x @ W.T + b).
    ref = jnp.maximum(jnp.maximum(x @ w1.T + b1, 0.0) @ w2.T + b2, 0.0)
    assert out.shape == (B, D_OUT)
    assert jnp.allclose(out, ref, atol=1e-5, rtol=1e-5), float(
        jnp.max(jnp.abs(out - ref)))

    print("KERNEL_OK")
</pallas_src>

<mosaic_0001>
module attributes {stable_mosaic.version = 11 : i64} {
  func.func @mlp_kernel(%arg0: i32, %arg1: memref<128x32xf32, #tpu.memory_space<vmem>>, %arg2: memref<32x64xf32, #tpu.memory_space<vmem>>, %arg3: memref<1x64xf32, #tpu.memory_space<vmem>>, %arg4: memref<64x32xf32, #tpu.memory_space<vmem>>, %arg5: memref<1x32xf32, #tpu.memory_space<vmem>>, %arg6: memref<128x32xf32, #tpu.memory_space<vmem>>) attributes {dimension_semantics = [#tpu.dimension_semantics<parallel>], iteration_bounds = array<i64: 1>, scalar_prefetch = 0 : i64, scratch_operands = 0 : i64, tpu.core_type = #tpu.core_type<tc>, window_params = [{transform_indices = @transform_0, window_bounds = array<i64: 128, 32>}, {pipeline_mode = #tpu.pipeline_mode<synchronous>, transform_indices = @transform_1, window_bounds = array<i64: 32, 64>}, {pipeline_mode = #tpu.pipeline_mode<synchronous>, transform_indices = @transform_2, window_bounds = array<i64: 1, 64>}, {pipeline_mode = #tpu.pipeline_mode<synchronous>, transform_indices = @transform_3, window_bounds = array<i64: 64, 32>}, {pipeline_mode = #tpu.pipeline_mode<synchronous>, transform_indices = @transform_4, window_bounds = array<i64: 1, 32>}, {transform_indices = @transform_5, window_bounds = array<i64: 128, 32>}]} {
    %c0 = arith.constant 0 : index
    %c0_0 = arith.constant 0 : index
    %0 = vector.load %arg1[%c0, %c0_0] : memref<128x32xf32, #tpu.memory_space<vmem>>, vector<128x32xf32>
    %c0_1 = arith.constant 0 : index
    %c0_2 = arith.constant 0 : index
    %1 = vector.load %arg2[%c0_1, %c0_2] : memref<32x64xf32, #tpu.memory_space<vmem>>, vector<32x64xf32>
    %cst = arith.constant dense<0.000000e+00> : vector<128x64xf32>
    %2 = tpu.matmul %0, %1, %cst {dimension_numbers = #tpu.dot_dimension_numbers<[1], [0], [0], [1], [0, 0, 1, 1], [], []>} : vector<128x32xf32>, vector<32x64xf32>, vector<128x64xf32> -> vector<128x64xf32>
    %c0_3 = arith.constant 0 : index
    %c0_4 = arith.constant 0 : index
    %3 = vector.load %arg3[%c0_3, %c0_4] : memref<1x64xf32, #tpu.memory_space<vmem>>, vector<1x64xf32>
    %4 = vector.broadcast %3 : vector<1x64xf32> to vector<128x64xf32>
    %5 = arith.addf %2, %4 : vector<128x64xf32>
    %cst_5 = arith.constant 0.000000e+00 : f32
    %6 = vector.broadcast %cst_5 : f32 to vector<128x64xf32>
    %7 = arith.maximumf %5, %6 : vector<128x64xf32>
    %c0_6 = arith.constant 0 : index
    %c0_7 = arith.constant 0 : index
    %8 = vector.load %arg4[%c0_6, %c0_7] : memref<64x32xf32, #tpu.memory_space<vmem>>, vector<64x32xf32>
    %cst_8 = arith.constant dense<0.000000e+00> : vector<128x32xf32>
    %9 = tpu.matmul %7, %8, %cst_8 {dimension_numbers = #tpu.dot_dimension_numbers<[1], [0], [0], [1], [0, 0, 1, 1], [], []>} : vector<128x64xf32>, vector<64x32xf32>, vector<128x32xf32> -> vector<128x32xf32>
    %c0_9 = arith.constant 0 : index
    %c0_10 = arith.constant 0 : index
    %10 = vector.load %arg5[%c0_9, %c0_10] : memref<1x32xf32, #tpu.memory_space<vmem>>, vector<1x32xf32>
    %11 = vector.broadcast %10 : vector<1x32xf32> to vector<128x32xf32>
    %12 = arith.addf %9, %11 : vector<128x32xf32>
    %cst_11 = arith.constant 0.000000e+00 : f32
    %13 = vector.broadcast %cst_11 : f32 to vector<128x32xf32>
    %14 = arith.maximumf %12, %13 : vector<128x32xf32>
    %c0_12 = arith.constant 0 : index
    %c0_13 = arith.constant 0 : index
    %15 = vector.load %arg6[%c0_12, %c0_13] : memref<128x32xf32, #tpu.memory_space<vmem>>, vector<128x32xf32>
    tpu.vector_store %arg6[%c0_12, %c0_13], %14 {strides = array<i32>} : memref<128x32xf32, #tpu.memory_space<vmem>>, vector<128x32xf32>,
    return
  }
  func.func @transform_0(%arg0: i32) -> (i32, i32) {
    %c0_i32 = arith.constant 0 : i32
    %c0_i32_0 = arith.constant 0 : i32
    return %arg0, %c0_i32 : i32, i32
  }
  func.func @transform_1(%arg0: i32) -> (i32, i32) {
    %c0_i32 = arith.constant 0 : i32
    %c0_i32_0 = arith.constant 0 : i32
    %c0_i32_1 = arith.constant 0 : i32
    return %c0_i32, %c0_i32_0 : i32, i32
  }
  func.func @transform_2(%arg0: i32) -> (i32, i32) {
    %c0_i32 = arith.constant 0 : i32
    %c0_i32_0 = arith.constant 0 : i32
    %c0_i32_1 = arith.constant 0 : i32
    return %c0_i32, %c0_i32_0 : i32, i32
  }
  func.func @transform_3(%arg0: i32) -> (i32, i32) {
    %c0_i32 = arith.constant 0 : i32
    %c0_i32_0 = arith.constant 0 : i32
    %c0_i32_1 = arith.constant 0 : i32
    return %c0_i32, %c0_i32_0 : i32, i32
  }
  func.func @transform_4(%arg0: i32) -> (i32, i32) {
    %c0_i32 = arith.constant 0 : i32
    %c0_i32_0 = arith.constant 0 : i32
    %c0_i32_1 = arith.constant 0 : i32
    return %c0_i32, %c0_i32_0 : i32, i32
  }
  func.func @transform_5(%arg0: i32) -> (i32, i32) {
    %c0_i32 = arith.constant 0 : i32
    %c0_i32_0 = arith.constant 0 : i32
    return %arg0, %c0_i32 : i32, i32
  }
}

</mosaic_0001>

<llo_original>
// kernel: mlp_forward.1
$region0: #{mlp_forward.1}
  #allocation0 [shape = 'u32[]', space=smem, size = 0x4, offset = 0x4, fixed_abs, tag = 'smem constant byte address 0x4 - core index']
  #allocation1 [shape = 'u32[72,128]{1,0:T(1,128)}', space=vmem, size = 0x9000, scoped, tag = 'internal scratch']
  %s0 = inlined_call_operand.vmem [shape: f32[128,32], index: 0, kind: input, shape index: {}]
  %s1 = inlined_call_operand.vmem [shape: f32[32,64], index: 1, kind: input, shape index: {}]
  %s2 = inlined_call_operand.vmem [shape: f32[1,64], index: 2, kind: input, shape index: {}]
  %s3 = inlined_call_operand.vmem [shape: f32[64,32], index: 3, kind: input, shape index: {}]
  %s4 = inlined_call_operand.vmem [shape: f32[1,32], index: 4, kind: input, shape index: {}]
  %s5 = inlined_call_operand.vmem [shape: f32[128,32], index: 5, kind: output, shape index: {}]
  %s6 = sld [smem:[#allocation0]]
  $region30: #{mlp_forward.1} parent=0
    _
  %s8 = ssub.s32 1, %s6
  %s9 = scalar_select 0, %s8, %s6
  // Predicated region
  $region2: #{mlp_forward.1} parent=0 // pred_check
    _
  $region3: #{mlp_forward.1} parent=0 // pred_check_branch
    %11 = sbr.rel (0) target = $region5
  $region4: #{mlp_forward.1} parent=0 // pred_region
    _
  $region5: #{mlp_forward.1} parent=0 // pred_fallthru
    _
  // Predicated region
  $region6: #{mlp_forward.1} parent=0 // pred_check
    _
  $region7: #{mlp_forward.1} parent=0 // pred_check_branch
    %13 = sbr.rel (0) target = $region9
  $region8: #{mlp_forward.1} parent=0 // pred_region
    _
  $region9: #{mlp_forward.1} parent=0 // pred_fallthru
    _
  // Predicated region
  $region10: #{mlp_forward.1} parent=0 // pred_check
    _
  $region11: #{mlp_forward.1} parent=0 // pred_check_branch
    %15 = sbr.rel (0) target = $region13
  $region12: #{mlp_forward.1} parent=0 // pred_region
    _
  $region13: #{mlp_forward.1} parent=0 // pred_fallthru
    _
  // Predicated region
  $region14: #{mlp_forward.1} parent=0 // pred_check
    _
  $region15: #{mlp_forward.1} parent=0 // pred_check_branch
    %17 = sbr.rel (0) target = $region17
  $region16: #{mlp_forward.1} parent=0 // pred_region
    _
  $region17: #{mlp_forward.1} parent=0 // pred_fallthru
    _
  // Predicated region
  $region18: #{mlp_forward.1} parent=0 // pred_check
    _
  $region19: #{mlp_forward.1} parent=0 // pred_check_branch
    %19 = sbr.rel (0) target = $region21
  $region20: #{mlp_forward.1} parent=0 // pred_region
    _
  $region21: #{mlp_forward.1} parent=0 // pred_fallthru
    _
  %v20 = vld [vmem:[%s0] sm:$0xff]
  %v21 = vld [vmem:[%s0 + $0x8] sm:$0xff]
  %v22 = vld [vmem:[%s0 + $0x10] sm:$0xff]
  %v23 = vld [vmem:[%s0 + $0x18] sm:$0xff]
  %v24 = vld [vmem:[%s0 + $0x20] sm:$0xff]
  %v25 = vld [vmem:[%s0 + $0x28] sm:$0xff]
  %v26 = vld [vmem:[%s0 + $0x30] sm:$0xff]
  %v27 = vld [vmem:[%s0 + $0x38] sm:$0xff]
  %v28 = vld [vmem:[%s0 + $0x40] sm:$0xff]
  %v29 = vld [vmem:[%s0 + $0x48] sm:$0xff]
  %v30 = vld [vmem:[%s0 + $0x50] sm:$0xff]
  %v31 = vld [vmem:[%s0 + $0x58] sm:$0xff]
  %v32 = vld [vmem:[%s0 + $0x60] sm:$0xff]
  %v33 = vld [vmem:[%s0 + $0x68] sm:$0xff]
  %v34 = vld [vmem:[%s0 + $0x70] sm:$0xff]
  %v35 = vld [vmem:[%s0 + $0x78] sm:$0xff]
  %v36 = vld [vmem:[%s1] sm:$0xff]
  %v37 = vld [vmem:[%s1 + $0x8] sm:$0xff]
  %v38 = vld [vmem:[%s1 + $0x10] sm:$0xff]
  %v39 = vld [vmem:[%s1 + $0x18] sm:$0xff]
  %v40 = vld [vmem:[%s2] sm:$0x1]
  %v42 = vperm.slane %v40, 0
  %vm44 = vcmask 261120
  %v46 = vsel %vm44, %v20, 0
  %v49 = vsel %vm44, %v21, 0
  %v52 = vsel %vm44, %v22, 0
  %v55 = vsel %vm44, %v23, 0
  %v58 = vsel %vm44, %v24, 0
  %v61 = vsel %vm44, %v25, 0
  %v64 = vsel %vm44, %v26, 0
  %v67 = vsel %vm44, %v27, 0
  %v70 = vsel %vm44, %v28, 0
  %v73 = vsel %vm44, %v29, 0
  %v76 = vsel %vm44, %v30, 0
  %v79 = vsel %vm44, %v31, 0
  %v82 = vsel %vm44, %v32, 0
  %v85 = vsel %vm44, %v33, 0
  %v88 = vsel %vm44, %v34, 0
  %v91 = vsel %vm44, %v35, 0
  %93 = vmatpush.msra.mxu0 0.0
  %94 = vmatpush.msra.mxu0 0.0
  %95 = vmatpush.msra.mxu0 0.0
  %96 = vmatpush.msra.mxu0 0.0
  %97 = vmatpush.msra.mxu0 0.0
  %98 = vmatpush.msra.mxu0 0.0
  %99 = vmatpush.msra.mxu0 0.0
  %100 = vmatpush.msra.mxu0 0.0
  %101 = vmatpush.msra.mxu0 0.0
  %102 = vmatpush.msra.mxu0 0.0
  %103 = vmatpush.msra.mxu0 0.0
  %104 = vmatpush.msra.mxu0 0.0
  %105 = vmatpush.msra.mxu0 %v39
  %106 = vmatpush.msra.mxu0 %v38
  %107 = vmatpush.msra.mxu0 %v37
  %108 = vmatpush.msra.mxu0 %v36
  %109 = vmatmul.f32.gmra.mxu0 %v46
  %v110 = vpop.f32.mrf.mxu0
  %v111 = vadd.f32 %v42, %v110
  %112 = vmatmul.f32.gmra.mxu0 %v49
  %v113 = vpop.f32.mrf.mxu0
  %v114 = vadd.f32 %v42, %v113
  %115 = vmatmul.f32.gmra.mxu0 %v52
  %v116 = vpop.f32.mrf.mxu0
  %v117 = vadd.f32 %v42, %v116
  %118 = vmatmul.f32.gmra.mxu0 %v55
  %v119 = vpop.f32.mrf.mxu0
  %v120 = vadd.f32 %v42, %v119
  %121 = vmatmul.f32.gmra.mxu0 %v58
  %v122 = vpop.f32.mrf.mxu0
  %v123 = vadd.f32 %v42, %v122
  %124 = vmatmul.f32.gmra.mxu0 %v61
  %v125 = vpop.f32.mrf.mxu0
  %v126 = vadd.f32 %v42, %v125
  %127 = vmatmul.f32.gmra.mxu0 %v64
  %v128 = vpop.f32.mrf.mxu0
  %v129 = vadd.f32 %v42, %v128
  %130 = vmatmul.f32.gmra.mxu0 %v67
  %v131 = vpop.f32.mrf.mxu0
  %v132 = vadd.f32 %v42, %v131
  %133 = vmatmul.f32.gmra.mxu0 %v70
  %v134 = vpop.f32.mrf.mxu0
  %v135 = vadd.f32 %v42, %v134
  %136 = vmatmul.f32.gmra.mxu0 %v73
  %v137 = vpop.f32.mrf.mxu0
  %v138 = vadd.f32 %v42, %v137
  %139 = vmatmul.f32.gmra.mxu0 %v76
  %v140 = vpop.f32.mrf.mxu0
  %v141 = vadd.f32 %v42, %v140
  %142 = vmatmul.f32.gmra.mxu0 %v79
  %v143 = vpop.f32.mrf.mxu0
  %v144 = vadd.f32 %v42, %v143
  %145 = vmatmul.f32.gmra.mxu0 %v82
  %v146 = vpop.f32.mrf.mxu0
  %v147 = vadd.f32 %v42, %v146
  %148 = vmatmul.f32.gmra.mxu0 %v85
  %v149 = vpop.f32.mrf.mxu0
  %v150 = vadd.f32 %v42, %v149
  %151 = vmatmul.f32.gmra.mxu0 %v88
  %v152 = vpop.f32.mrf.mxu0
  %v153 = vadd.f32 %v42, %v152
  %154 = vmatmul.f32.gmra.mxu0 %v91
  %v155 = vpop.f32.mrf.mxu0
  %v156 = vadd.f32 %v42, %v155
  %157 = vdwg.mxu0
  %v158 = vmax.f32 %v111, 0.0
  %v159 = vmax.f32 %v114, 0.0
  %v160 = vmax.f32 %v117, 0.0
  %v161 = vmax.f32 %v120, 0.0
  %v162 = vmax.f32 %v123, 0.0
  %v163 = vmax.f32 %v126, 0.0
  %v164 = vmax.f32 %v129, 0.0
  %v165 = vmax.f32 %v132, 0.0
  %v166 = vmax.f32 %v135, 0.0
  %v167 = vmax.f32 %v138, 0.0
  %v168 = vmax.f32 %v141, 0.0
  %v169 = vmax.f32 %v144, 0.0
  %v170 = vmax.f32 %v147, 0.0
  %v171 = vmax.f32 %v150, 0.0
  %v172 = vmax.f32 %v153, 0.0
  %v173 = vmax.f32 %v156, 0.0
  %v174 = vld [vmem:[%s3] sm:$0xff]
  %v175 = vld [vmem:[%s3 + $0x8] sm:$0xff]
  %v176 = vld [vmem:[%s3 + $0x10] sm:$0xff]
  %v177 = vld [vmem:[%s3 + $0x18] sm:$0xff]
  %v178 = vld [vmem:[%s3 + $0x20] sm:$0xff]
  %v179 = vld [vmem:[%s3 + $0x28] sm:$0xff]
  %v180 = vld [vmem:[%s3 + $0x30] sm:$0xff]
  %v181 = vld [vmem:[%s3 + $0x38] sm:$0xff]
  %v182 = vld [vmem:[%s4] sm:$0x1]
  %v184 = vperm.slane %v182, 0
  %vm186 = vcmask 523264
  %v188 = vsel %vm186, %v158, 0
  %v191 = vsel %vm186, %v159, 0
  %v194 = vsel %vm186, %v160, 0
  %v197 = vsel %vm186, %v161, 0
  %v200 = vsel %vm186, %v162, 0
  %v203 = vsel %vm186, %v163, 0
  %v206 = vsel %vm186, %v164, 0
  %v209 = vsel %vm186, %v165, 0
  %v212 = vsel %vm186, %v166, 0
  %v215 = vsel %vm186, %v167, 0
  %v218 = vsel %vm186, %v168, 0
  %v221 = vsel %vm186, %v169, 0
  %v224 = vsel %vm186, %v170, 0
  %v227 = vsel %vm186, %v171, 0
  %v230 = vsel %vm186, %v172, 0
  %v233 = vsel %vm186, %v173, 0
  %235 = vmatpush.msra.mxu0 0.0
  %236 = vmatpush.msra.mxu0 0.0
  %237 = vmatpush.msra.mxu0 0.0
  %238 = vmatpush.msra.mxu0 0.0
  %239 = vmatpush.msra.mxu0 0.0
  %240 = vmatpush.msra.mxu0 0.0
  %241 = vmatpush.msra.mxu0 0.0
  %242 = vmatpush.msra.mxu0 0.0
  %243 = vmatpush.msra.mxu0 %v181
  %244 = vmatpush.msra.mxu0 %v180
  %245 = vmatpush.msra.mxu0 %v179
  %246 = vmatpush.msra.mxu0 %v178
  %247 = vmatpush.msra.mxu0 %v177
  %248 = vmatpush.msra.mxu0 %v176
  %249 = vmatpush.msra.mxu0 %v175
  %250 = vmatpush.msra.mxu0 %v174
  %251 = vmatmul.f32.gmra.mxu0 %v188
  %v252 = vpop.f32.mrf.mxu0
  %v253 = vadd.f32 %v184, %v252
  %254 = vmatmul.f32.gmra.mxu0 %v191
  %v255 = vpop.f32.mrf.mxu0
  %v256 = vadd.f32 %v184, %v255
  %257 = vmatmul.f32.gmra.mxu0 %v194
  %v258 = vpop.f32.mrf.mxu0
  %v259 = vadd.f32 %v184, %v258
  %260 = vmatmul.f32.gmra.mxu0 %v197
  %v261 = vpop.f32.mrf.mxu0
  %v262 = vadd.f32 %v184, %v261
  %263 = vmatmul.f32.gmra.mxu0 %v200
  %v264 = vpop.f32.mrf.mxu0
  %v265 = vadd.f32 %v184, %v264
  %266 = vmatmul.f32.gmra.mxu0 %v203
  %v267 = vpop.f32.mrf.mxu0
  %v268 = vadd.f32 %v184, %v267
  %269 = vmatmul.f32.gmra.mxu0 %v206
  %v270 = vpop.f32.mrf.mxu0
  %v271 = vadd.f32 %v184, %v270
  %272 = vmatmul.f32.gmra.mxu0 %v209
  %v273 = vpop.f32.mrf.mxu0
  %v274 = vadd.f32 %v184, %v273
  %275 = vmatmul.f32.gmra.mxu0 %v212
  %v276 = vpop.f32.mrf.mxu0
  %v277 = vadd.f32 %v184, %v276
  %278 = vmatmul.f32.gmra.mxu0 %v215
  %v279 = vpop.f32.mrf.mxu0
  %v280 = vadd.f32 %v184, %v279
  %281 = vmatmul.f32.gmra.mxu0 %v218
  %v282 = vpop.f32.mrf.mxu0
  %v283 = vadd.f32 %v184, %v282
  %284 = vmatmul.f32.gmra.mxu0 %v221
  %v285 = vpop.f32.mrf.mxu0
  %v286 = vadd.f32 %v184, %v285
  %287 = vmatmul.f32.gmra.mxu0 %v224
  %v288 = vpop.f32.mrf.mxu0
  %v289 = vadd.f32 %v184, %v288
  %290 = vmatmul.f32.gmra.mxu0 %v227
  %v291 = vpop.f32.mrf.mxu0
  %v292 = vadd.f32 %v184, %v291
  %293 = vmatmul.f32.gmra.mxu0 %v230
  %v294 = vpop.f32.mrf.mxu0
  %v295 = vadd.f32 %v184, %v294
  %296 = vmatmul.f32.gmra.mxu0 %v233
  %v297 = vpop.f32.mrf.mxu0
  %v298 = vadd.f32 %v184, %v297
  %299 = vdwg.mxu0
  %v300 = vmax.f32 %v253, 0.0
  %v301 = vmax.f32 %v256, 0.0
  %v302 = vmax.f32 %v259, 0.0
  %v303 = vmax.f32 %v262, 0.0
  %v304 = vmax.f32 %v265, 0.0
  %v305 = vmax.f32 %v268, 0.0
  %v306 = vmax.f32 %v271, 0.0
  %v307 = vmax.f32 %v274, 0.0
  %v308 = vmax.f32 %v277, 0.0
  %v309 = vmax.f32 %v280, 0.0
  %v310 = vmax.f32 %v283, 0.0
  %v311 = vmax.f32 %v286, 0.0
  %v312 = vmax.f32 %v289, 0.0
  %v313 = vmax.f32 %v292, 0.0
  %v314 = vmax.f32 %v295, 0.0
  %v315 = vmax.f32 %v298, 0.0
  %316 = vst.msk [vmem:[%s5] sm:$0xff] %vm44, %v300
  %317 = vst.msk [vmem:[%s5 + $0x8] sm:$0xff] %vm44, %v301
  %318 = vst.msk [vmem:[%s5 + $0x10] sm:$0xff] %vm44, %v302
  %319 = vst.msk [vmem:[%s5 + $0x18] sm:$0xff] %vm44, %v303
  %320 = vst.msk [vmem:[%s5 + $0x20] sm:$0xff] %vm44, %v304
  %321 = vst.msk [vmem:[%s5 + $0x28] sm:$0xff] %vm44, %v305
  %322 = vst.msk [vmem:[%s5 + $0x30] sm:$0xff] %vm44, %v306
  %323 = vst.msk [vmem:[%s5 + $0x38] sm:$0xff] %vm44, %v307
  %324 = vst.msk [vmem:[%s5 + $0x40] sm:$0xff] %vm44, %v308
  %325 = vst.msk [vmem:[%s5 + $0x48] sm:$0xff] %vm44, %v309
  %326 = vst.msk [vmem:[%s5 + $0x50] sm:$0xff] %vm44, %v310
  %327 = vst.msk [vmem:[%s5 + $0x58] sm:$0xff] %vm44, %v311
  %328 = vst.msk [vmem:[%s5 + $0x60] sm:$0xff] %vm44, %v312
  %329 = vst.msk [vmem:[%s5 + $0x68] sm:$0xff] %vm44, %v313
  %330 = vst.msk [vmem:[%s5 + $0x70] sm:$0xff] %vm44, %v314
  %331 = vst.msk [vmem:[%s5 + $0x78] sm:$0xff] %vm44, %v315
  // Predicated region
  $region22: #{mlp_forward.1} parent=0 // pred_check
    _
  $region23: #{mlp_forward.1} parent=0 // pred_check_branch
    %333 = sbr.rel (0) target = $region25
  $region24: #{mlp_forward.1} parent=0 // pred_region
    _
  $region25: #{mlp_forward.1} parent=0 // pred_fallthru
    _
  // Predicated region
  $region26: #{mlp_forward.1} parent=0 // pred_check
    _
  $region27: #{mlp_forward.1} parent=0 // pred_check_branch
    %335 = sbr.rel (0) target = $region29
  $region28: #{mlp_forward.1} parent=0 // pred_region
    _
  $region29: #{mlp_forward.1} parent=0 // pred_fallthru
    _

</llo_original>
